<compile_context>
chip_gen: v6e
topology: v6e:2x2x1
jax: 0.10.0
libtpu: 0.0.40
codegen_flags: <defaults>
</compile_context>

<pallas_src>
import numpy as np
import jax
import jax.numpy as jnp
from jax.experimental import pallas as pl
from jax.experimental.pallas import tpu as pltpu


def _round_up(x: int, m: int) -> int:
    return ((x + m - 1) // m) * m


# ---------------------------------------------------------------------------
# Pallas kernel 1: tiled pairwise SQUARED Euclidean distances (VPU formulation)
# ---------------------------------------------------------------------------
def _pairwise_d2_kernel(xr_ref, xct_ref, d_ref):
    # xr_ref : [TM, dim]  row-block of points
    # xct_ref: [dim, TN]  column-block of points (pre-transposed in the wrapper)
    xr = xr_ref[...].astype(jnp.float32)
    xct = xct_ref[...].astype(jnp.float32)
    dim = xr.shape[1]
    acc = jnp.zeros(d_ref.shape, jnp.float32)
    for d in range(dim):                                  # static unroll (dim ~ 3)
        diff = xr[:, d:d + 1] - xct[d:d + 1, :]           # [TM,1]-[1,TN] -> [TM,TN]
        acc = acc + diff * diff
    d_ref[...] = acc                                      # squared distances (no sqrt)


def pairwise_sq_distances(coords, tm=512, tn=512):
    n, dim = coords.shape
    tm = min(tm, _round_up(n, 8))
    tn = min(tn, _round_up(n, 128))
    n_pad_r = _round_up(n, tm)
    n_pad_c = _round_up(n, tn)
    xr = jnp.pad(coords, ((0, n_pad_r - n), (0, 0)))            # [n_pad_r, dim]
    xct = jnp.pad(coords, ((0, n_pad_c - n), (0, 0))).T         # [dim, n_pad_c]
    d2 = pl.pallas_call(
        _pairwise_d2_kernel,
        out_shape=jax.ShapeDtypeStruct((n_pad_r, n_pad_c), jnp.float32),
        grid=(n_pad_r // tm, n_pad_c // tn),
        in_specs=[pl.BlockSpec((tm, dim), lambda i, j: (i, 0)),
                  pl.BlockSpec((dim, tn), lambda i, j: (0, j))],
        out_specs=pl.BlockSpec((tm, tn), lambda i, j: (i, j)),
        compiler_params=pltpu.CompilerParams(
            dimension_semantics=("parallel", "parallel")),
    )(xr, xct)
    return d2[:n, :n]


# ---------------------------------------------------------------------------
# Pallas kernel 2: Gaussian range embedding  exp(-d^2 * inv), inv = 0.5/sigma^2
#   (leading pad row zeroed once via pl.when; lane-dense 128-wide output)
# ---------------------------------------------------------------------------
def _gaussian_embed_kernel(m2_ref, inv_ref, o_ref):
    m2 = m2_ref[...]                          # [TILE, 1]   squared kNN distances
    inv = inv_ref[...]                        # [1, n_out_pad]
    o_ref[...] = jnp.exp(-m2 * inv)           # exp on EUP; no divide, no m*m

    @pl.when(pl.program_id(0) == 0)           # cold path: k_dist_range[0, :] = 0
    def _():
        o_ref[0:1, :] = jnp.zeros((1, o_ref.shape[1]), o_ref.dtype)


def gaussian_embedding(m2_flat, inv_padded, tile_max=2048):
    lm = m2_flat.shape[0]
    n_lanes = inv_padded.shape[0]                       # multiple of 128
    tile = min(tile_max, _round_up(lm, 8))
    lm_pad = _round_up(lm, tile)
    m2 = jnp.pad(m2_flat, (0, lm_pad - lm)).reshape(lm_pad, 1)
    inv2 = inv_padded.reshape(1, n_lanes)
    return pl.pallas_call(
        _gaussian_embed_kernel,
        out_shape=jax.ShapeDtypeStruct((lm_pad, n_lanes), jnp.float32),
        grid=(lm_pad // tile,),
        in_specs=[pl.BlockSpec((tile, 1), lambda i: (i, 0)),
                  pl.BlockSpec((1, n_lanes), lambda i: (0, 0))],
        out_specs=pl.BlockSpec((tile, n_lanes), lambda i: (i, 0)),
        compiler_params=pltpu.CompilerParams(dimension_semantics=("parallel",)),
    )(m2, inv2)


# ---------------------------------------------------------------------------
# Module wrapper (mirrors torch SparseEdgeEmbeddingV4.forward semantics)
# ---------------------------------------------------------------------------
class SparseEdgeEmbeddingV4:
    def __init__(self, n_out: int, sigma: list, knn: int):
        self._range = np.linspace(sigma[0], sigma[1], n_out).astype(np.float32)
        with np.errstate(divide="ignore"):
            inv = (0.5 / (self._range.astype(np.float64) ** 2)).astype(np.float32)
        n_out_pad = _round_up(n_out, 128)                # lane-dense output width
        self._inv_padded = jnp.asarray(np.pad(inv, (0, n_out_pad - n_out)))
        self.knn = knn
        self.df_knn = None
        self.n_out = n_out
        self.sigma = sigma

    def forward(self, input_coord):
        coords = jnp.asarray(input_coord, dtype=jnp.float32)
        n = int(coords.shape[0])
        if n < self.knn:
            self.df_knn = int(self.knn)
            self.knn = n

        # --- kNN: Pallas tiled squared-distance kernel + top_k on device -----
        d2 = pairwise_sq_distances(coords)
        # TODO(synk): top-k / sort has no clean Pallas TPU equivalent; done in lax.
        neg_d2, idx = jax.lax.top_k(-d2, self.knn)       # ordering of d2 == ordering of d
        d2_knn = -neg_d2                                 # [n, knn] ascending, self first

        # --- Gaussian range embedding: stays on device (no host round trip) --
        m2_flat = jnp.concatenate(
            [jnp.zeros((1,), jnp.float32), d2_knn.reshape(-1)])     # leading zero row
        k_dist_range = gaussian_embedding(m2_flat, self._inv_padded)
        lm = n * self.knn + 1
        k_dist_range = k_dist_range[:lm, :self.n_out]
        if np.any(self._range == 0.0):                   # NaN only possible if sigma==0
            k_dist_range = jnp.where(jnp.isnan(k_dist_range), 0.0, k_dist_range)

        # --- host-side index bookkeeping (pure numpy glue, as in reference) --
        # (squared distances have identical ordering, so argsort results match)
        indices = np.asarray(idx)
        M = np.asarray(d2_knn).reshape(-1)
        all_ij_id = np.array(
            (np.repeat(np.arange(n), self.knn), indices.flatten())).T
        row_idx = np.repeat(
            np.arange(0, len(M)).reshape(n, self.knn), self.knn, axis=0
        ).reshape(len(M), self.knn)
        row_idx = np.vstack((np.repeat(0, self.knn), row_idx))
        col_idx = np.array([
            np.pad(c, (0, self.knn - len(c))) if len(c) <= self.knn
            else c[np.argsort(M[c - 1])[: self.knn]]
            for c in [np.where(all_ij_id[:, 1] == i)[0] + 1 for i in range(n)]
        ])
        col_idx = np.repeat(col_idx, self.knn, axis=0)
        col_idx = np.vstack((np.repeat(0, self.knn), col_idx))

        if self.df_knn is not None:
            self.knn = int(self.df_knn)
            self.df_knn = None

        return (
            k_dist_range,
            [row_idx.astype(np.int32), col_idx.astype(np.int32), (n, n),
             all_ij_id.astype(np.int32)],
        )


if __name__ == "__main__":
    key = jax.random.PRNGKey(0)
    n, dim = 32, 3
    n_out, knn = 32, 8
    coords = jax.random.uniform(key, (n, dim), dtype=jnp.float32) * 25.0

    module = SparseEdgeEmbeddingV4(n_out=n_out, sigma=[0.2, 5.0], knn=knn)
    k_dist, (row_idx, col_idx, shape_nn, all_ij_id) = module.forward(coords)
    k_dist = jax.block_until_ready(k_dist)

    # structural checks
    assert k_dist.shape == (n * knn + 1, n_out)
    assert k_dist.dtype == jnp.float32
    assert row_idx.shape == (n * knn + 1, knn)
    assert col_idx.shape == (n * knn + 1, knn)
    assert shape_nn == (n, n)
    assert all_ij_id.shape == (n * knn, 2)
    assert bool(jnp.all(k_dist[0] == 0.0))
    assert bool(jnp.all(jnp.isfinite(k_dist)))

    # numeric check vs. dense numpy reference (same semantics as the torch module)
    c_np = np.asarray(coords, dtype=np.float32)
    diff = c_np[:, None, :] - c_np[None, :, :]
    d_ref = np.sqrt(np.sum(diff * diff, axis=-1))
    d_knn_ref = np.sort(d_ref, axis=1)[:, :knn]
    m_ref = np.concatenate([[0.0], d_knn_ref.reshape(-1)]).astype(np.float32)
    sig = np.linspace(0.2, 5.0, n_out).astype(np.float32)
    ref = np.exp(-(m_ref[:, None] ** 2) / (2.0 * sig[None, :] ** 2))
    ref[0, :] = 0.0
    np.testing.assert_allclose(np.asarray(k_dist), ref, atol=1e-4, rtol=1e-3)

    print("KERNEL_OK")
</pallas_src>

<mosaic_0001>
module attributes {stable_mosaic.version = 11 : i64} {
  func.func @_pairwise_d2_kernel(%arg0: i32, %arg1: i32, %arg2: memref<32x3xf32, #tpu.memory_space<vmem>>, %arg3: memref<3x128xf32, #tpu.memory_space<vmem>>, %arg4: memref<32x128xf32, #tpu.memory_space<vmem>>) attributes {dimension_semantics = [#tpu.dimension_semantics<parallel>, #tpu.dimension_semantics<parallel>], iteration_bounds = array<i64: 1, 1>, scalar_prefetch = 0 : i64, scratch_operands = 0 : i64, tpu.core_type = #tpu.core_type<tc>, window_params = [{transform_indices = @transform_0, window_bounds = array<i64: 32, 3>}, {transform_indices = @transform_1, window_bounds = array<i64: 3, 128>}, {transform_indices = @transform_2, window_bounds = array<i64: 32, 128>}]} {
    %c0 = arith.constant 0 : index
    %c0_0 = arith.constant 0 : index
    %0 = vector.load %arg2[%c0, %c0_0] : memref<32x3xf32, #tpu.memory_space<vmem>>, vector<32x3xf32>
    %c0_1 = arith.constant 0 : index
    %c0_2 = arith.constant 0 : index
    %1 = vector.load %arg3[%c0_1, %c0_2] : memref<3x128xf32, #tpu.memory_space<vmem>>, vector<3x128xf32>
    %cst = arith.constant 0.000000e+00 : f32
    %2 = vector.broadcast %cst : f32 to vector<32x128xf32>
    %3 = vector.extract_strided_slice %0 {offsets = [0, 0], sizes = [32, 1], strides = [1, 1]} : vector<32x3xf32> to vector<32x1xf32>
    %4 = vector.extract_strided_slice %1 {offsets = [0, 0], sizes = [1, 128], strides = [1, 1]} : vector<3x128xf32> to vector<1x128xf32>
    %5 = vector.broadcast %3 : vector<32x1xf32> to vector<32x128xf32>
    %6 = vector.broadcast %4 : vector<1x128xf32> to vector<32x128xf32>
    %7 = arith.subf %5, %6 : vector<32x128xf32>
    %8 = arith.mulf %7, %7 : vector<32x128xf32>
    %9 = arith.addf %2, %8 : vector<32x128xf32>
    %10 = vector.extract_strided_slice %0 {offsets = [0, 1], sizes = [32, 1], strides = [1, 1]} : vector<32x3xf32> to vector<32x1xf32>
    %11 = vector.extract_strided_slice %1 {offsets = [1, 0], sizes = [1, 128], strides = [1, 1]} : vector<3x128xf32> to vector<1x128xf32>
    %12 = vector.broadcast %10 : vector<32x1xf32> to vector<32x128xf32>
    %13 = vector.broadcast %11 : vector<1x128xf32> to vector<32x128xf32>
    %14 = arith.subf %12, %13 : vector<32x128xf32>
    %15 = arith.mulf %14, %14 : vector<32x128xf32>
    %16 = arith.addf %9, %15 : vector<32x128xf32>
    %17 = vector.extract_strided_slice %0 {offsets = [0, 2], sizes = [32, 1], strides = [1, 1]} : vector<32x3xf32> to vector<32x1xf32>
    %18 = vector.extract_strided_slice %1 {offsets = [2, 0], sizes = [1, 128], strides = [1, 1]} : vector<3x128xf32> to vector<1x128xf32>
    %19 = vector.broadcast %17 : vector<32x1xf32> to vector<32x128xf32>
    %20 = vector.broadcast %18 : vector<1x128xf32> to vector<32x128xf32>
    %21 = arith.subf %19, %20 : vector<32x128xf32>
    %22 = arith.mulf %21, %21 : vector<32x128xf32>
    %23 = arith.addf %16, %22 : vector<32x128xf32>
    %c0_3 = arith.constant 0 : index
    %c0_4 = arith.constant 0 : index
    %24 = vector.load %arg4[%c0_3, %c0_4] : memref<32x128xf32, #tpu.memory_space<vmem>>, vector<32x128xf32>
    tpu.vector_store %arg4[%c0_3, %c0_4], %23 {strides = array<i32>} : memref<32x128xf32, #tpu.memory_space<vmem>>, vector<32x128xf32>,
    return
  }
  func.func @transform_0(%arg0: i32, %arg1: i32) -> (i32, i32) {
    %c0_i32 = arith.constant 0 : i32
    %c0_i32_0 = arith.constant 0 : i32
    return %arg0, %c0_i32 : i32, i32
  }
  func.func @transform_1(%arg0: i32, %arg1: i32) -> (i32, i32) {
    %c0_i32 = arith.constant 0 : i32
    %c0_i32_0 = arith.constant 0 : i32
    return %c0_i32, %arg1 : i32, i32
  }
  func.func @transform_2(%arg0: i32, %arg1: i32) -> (i32, i32) {
    %c0_i32 = arith.constant 0 : i32
    return %arg0, %arg1 : i32, i32
  }
}

</mosaic_0001>

<llo_original>
// kernel: tpu_custom_call.1
$region0: #{tpu_custom_call.1}
  #allocation0 [shape = 'u32[]', space=smem, size = 0x4, offset = 0x4, fixed_abs, tag = 'smem constant byte address 0x4 - core index']
  #allocation1 [shape = 'u32[144,128]{1,0:T(1,128)}', space=vmem, size = 0x12000, scoped, tag = 'internal scratch']
  %s0 = inlined_call_operand.vmem [shape: f32[32,3], index: 0, kind: input, shape index: {}]
  %s1 = inlined_call_operand.vmem [shape: f32[3,128], index: 1, kind: input, shape index: {}]
  %s2 = inlined_call_operand.hbm [shape: f32[32,128], index: 2, kind: output, shape index: {}]
  %s3 = sld [smem:[#allocation0]]
  $region18: #{tpu_custom_call.1} parent=0
    _
  %s5 = ssub.s32 1, %s3
  %s6 = scalar_select 0, %s5, %s3
  $region1: #{tpu_custom_call.1} parent=0
    #allocation2 [shape = 'u8[16384]{0}', space=vmem, size = 0x4000, scoped, tag = 'output window, operand 0, single buffered']
    #allocation3 [shape = 's32[1]{0}', space=sflag, size = 0x4, scoped, tag = 'scoped memory for tpu_custom_call.1']
    %7 = vsyncpa [#allocation3], 0
    // Predicated region
    $region2: #{tpu_custom_call.1} parent=1 // pred_check
      _
    $region3: #{tpu_custom_call.1} parent=1 // pred_check_branch
      %9 = sbr.rel (0) target = $region5
    $region4: #{tpu_custom_call.1} parent=1 // pred_region
      _
    $region5: #{tpu_custom_call.1} parent=1 // pred_fallthru
      _
    // Predicated region
    $region6: #{tpu_custom_call.1} parent=1 // pred_check
      _
    $region7: #{tpu_custom_call.1} parent=1 // pred_check_branch
      %11 = sbr.rel (0) target = $region9
    $region8: #{tpu_custom_call.1} parent=1 // pred_region
      _
    $region9: #{tpu_custom_call.1} parent=1 // pred_fallthru
      _
    %v12 = vld [vmem:[%s0] sm:$0xff]
    %v13 = vld [vmem:[%s0 + $0x8] sm:$0xff]
    %v14 = vld [vmem:[%s0 + $0x10] sm:$0xff]
    %v15 = vld [vmem:[%s0 + $0x18] sm:$0xff]
    %v16 = vld [vmem:[%s1] sm:$0x7]
    %18 = vset.pattern.permute.xlu0 0
    %19 = vperm.xlu0 %18, %v12
    %v20 = vpop.permute.xlu0 %19
    %23 = vset.pattern.permute.xlu0 0
    %24 = vperm.xlu0 %23, %v13
    %v25 = vpop.permute.xlu0 %24
    %28 = vset.pattern.permute.xlu0 0
    %29 = vperm.xlu0 %28, %v14
    %v30 = vpop.permute.xlu0 %29
    %33 = vset.pattern.permute.xlu0 0
    %34 = vperm.xlu0 %33, %v15
    %v35 = vpop.permute.xlu0 %34
    %v37 = vlaneseq
    %v38 = vshrl.u32 %v37, 7
    %v39 = vsub.s32 0, %v38
    %v40 = vrot.slane %v16, %v39
    %v41 = vsub.f32 %v20, %v40
    %v42 = vsub.f32 %v25, %v40
    %v43 = vsub.f32 %v30, %v40
    %v44 = vsub.f32 %v35, %v40
    %v45 = vmul.f32 %v41, %v41
    %v46 = vmul.f32 %v42, %v42
    %v47 = vmul.f32 %v43, %v43
    %v48 = vmul.f32 %v44, %v44
    %v49 = vadd.f32 %v45, 0.0
    %v50 = vadd.f32 %v46, 0.0
    %v51 = vadd.f32 %v47, 0.0
    %v52 = vadd.f32 %v48, 0.0
    %53 = vset.pattern.permute.xlu0 1
    %54 = vperm.xlu0 %53, %v12
    %v55 = vpop.permute.xlu0 %54
    %57 = vset.pattern.permute.xlu0 1
    %58 = vperm.xlu0 %57, %v13
    %v59 = vpop.permute.xlu0 %58
    %61 = vset.pattern.permute.xlu0 1
    %62 = vperm.xlu0 %61, %v14
    %v63 = vpop.permute.xlu0 %62
    %65 = vset.pattern.permute.xlu0 1
    %66 = vperm.xlu0 %65, %v15
    %v67 = vpop.permute.xlu0 %66
    %v69 = vlaneseq
    %v70 = vshrl.u32 %v69, 7
    %v71 = vsub.s32 1, %v70
    %v72 = vrot.slane %v16, %v71
    %v73 = vsub.f32 %v55, %v72
    %v74 = vsub.f32 %v59, %v72
    %v75 = vsub.f32 %v63, %v72
    %v76 = vsub.f32 %v67, %v72
    %v77 = vmul.f32 %v73, %v73
    %v78 = vmul.f32 %v74, %v74
    %v79 = vmul.f32 %v75, %v75
    %v80 = vmul.f32 %v76, %v76
    %v81 = vadd.f32 %v49, %v77
    %v82 = vadd.f32 %v50, %v78
    %v83 = vadd.f32 %v51, %v79
    %v84 = vadd.f32 %v52, %v80
    %85 = vset.pattern.permute.xlu0 2
    %86 = vperm.xlu0 %85, %v12
    %v87 = vpop.permute.xlu0 %86
    %89 = vset.pattern.permute.xlu0 2
    %90 = vperm.xlu0 %89, %v13
    %v91 = vpop.permute.xlu0 %90
    %93 = vset.pattern.permute.xlu0 2
    %94 = vperm.xlu0 %93, %v14
    %v95 = vpop.permute.xlu0 %94
    %97 = vset.pattern.permute.xlu0 2
    %98 = vperm.xlu0 %97, %v15
    %v99 = vpop.permute.xlu0 %98
    %v101 = vlaneseq
    %v102 = vshrl.u32 %v101, 7
    %v103 = vsub.s32 2, %v102
    %v104 = vrot.slane %v16, %v103
    %v105 = vsub.f32 %v87, %v104
    %v106 = vsub.f32 %v91, %v104
    %v107 = vsub.f32 %v95, %v104
    %v108 = vsub.f32 %v99, %v104
    %v109 = vmul.f32 %v105, %v105
    %v110 = vmul.f32 %v106, %v106
    %v111 = vmul.f32 %v107, %v107
    %v112 = vmul.f32 %v108, %v108
    %v113 = vadd.f32 %v81, %v109
    %v114 = vadd.f32 %v82, %v110
    %v115 = vadd.f32 %v83, %v111
    %v116 = vadd.f32 %v84, %v112
    %117 = vst [vmem:[#allocation2] sm:$0xff] %v113
    %118 = vst [vmem:[#allocation2 + $0x8] sm:$0xff] %v114
    %119 = vst [vmem:[#allocation2 + $0x10] sm:$0xff] %v115
    %120 = vst [vmem:[#allocation2 + $0x18] sm:$0xff] %v116
    // Predicated region
    $region10: #{tpu_custom_call.1} parent=1 // pred_check
      _
    $region11: #{tpu_custom_call.1} parent=1 // pred_check_branch
      %122 = sbr.rel (0) target = $region13
    $region12: #{tpu_custom_call.1} parent=1 // pred_region
      %s124 = ssub.s32 512, 512
      %125 = vsyncadd [#allocation3], %s124
      %s126 = sshll.u32 [#allocation2], 4
      %s127 = int_to_ptr.vmem [resolvable:$true] %s126
      %132 = dma.vmem_to_hbm [thread:$0]  %s127, 512, %s2, [#allocation3], 128, 128, 8
    $region13: #{tpu_custom_call.1} parent=1 // pred_fallthru
      _
    // Predicated region
    $region14: #{tpu_custom_call.1} parent=1 // pred_check
      _
    $region15: #{tpu_custom_call.1} parent=1 // pred_check_branch
      %134 = sbr.rel (0) target = $region17
    $region16: #{tpu_custom_call.1} parent=1 // pred_region
      %135 = dma.done [#allocation3], 512
    $region17: #{tpu_custom_call.1} parent=1 // pred_fallthru
      _
    %136 = vsyncpa [#allocation3], 1

</llo_original>
